<compile_context>
chip_gen: v7x
topology: tpu7x:2x2x1
jax: 0.10.0
libtpu: 0.0.40
codegen_flags: <defaults>
</compile_context>

<pallas_src>
import functools

import jax
import jax.numpy as jnp
from jax.experimental import pallas as pl
from jax.experimental.pallas import tpu as pltpu


def _kimcnn_kernel(Kmax, S, x_ref, w_ref, b_ref, mask_ref, fcw_ref, fcb_ref,
                   out_ref):
    """Fused KimCNN forward for one batch tile.

    x_ref    : (TB, S + Kmax - 1, E)   bf16, zero-extended along S (streams)
    w_ref    : (Kmax, E, C_pad)        bf16 fused conv weights   (resident)
    b_ref    : (1, C_pad)              f32 fused conv bias       (resident)
    mask_ref : (S, C_pad)              f32, 1.0 where time pos valid (resident)
    fcw_ref  : (C_pad, D_pad)          bf16 padded FC weight     (resident)
    fcb_ref  : (1, D_pad)              f32 padded FC bias        (resident)
    out_ref  : (TB, D_pad)             f32
    """
    TB = x_ref.shape[0]
    E = x_ref.shape[2]
    C_pad = w_ref.shape[2]

    x = x_ref[...]                                     # (TB, S_ext, E) bf16

    # Accumulated per-tap matmuls: same FLOPs as an im2col matmul but no
    # (TB*S, Kmax*E) slab and no zero-padded contraction.  f32 accumulation.
    acc = jnp.dot(x[:, 0:S, :].reshape(TB * S, E), w_ref[0],
                  preferred_element_type=jnp.float32)
    for k in range(1, Kmax):
        acc = acc + jnp.dot(x[:, k:k + S, :].reshape(TB * S, E), w_ref[k],
                            preferred_element_type=jnp.float32)

    # bias + ReLU + time-validity mask fused into one select (all f32 VPU).
    conv = acc.reshape(TB, S, C_pad)
    conv = jnp.where(mask_ref[...] != 0.0,
                     jnp.maximum(conv + b_ref[...], 0.0),
                     0.0)
    feat = jnp.max(conv, axis=1)                       # (TB, C_pad), f32

    out_ref[...] = (jnp.dot(feat.astype(fcw_ref.dtype), fcw_ref[...],
                            preferred_element_type=jnp.float32)
                    + fcb_ref[...])                    # (TB, D_pad)


def _round_up(n, m):
    return (n + m - 1) // m * m


def prepare_kimcnn_params(conv_ws, conv_bs, fc_w, fc_b, S,
                          param_dtype=jnp.bfloat16):
    """One-time weight fusion / lane padding (hoisted out of the forward).

    conv_ws[i]: (K_i, E, Co)  (= PyTorch Conv2d weight (Co,1,K,E) moved)
    conv_bs[i]: (1, Co)
    fc_w: (n_out, out_dim)    (= PyTorch Linear weight.T)
    fc_b: (1, out_dim)
    """
    Ks = tuple(int(w.shape[0]) for w in conv_ws)
    E = int(conv_ws[0].shape[1])
    Co = int(conv_ws[0].shape[2])
    nK = len(Ks)
    n_out = nK * Co
    out_dim = int(fc_w.shape[1])
    Kmax = max(Ks)
    C_pad = _round_up(n_out, 128)
    D_pad = _round_up(out_dim, 128)

    # Fuse all filter sizes into one (Kmax, E, C_pad) weight, one bias row and
    # one (S, C_pad) time-validity mask (shorter filters zero-padded in taps).
    w_fused = jnp.zeros((Kmax, E, C_pad), jnp.float32)
    b_fused = jnp.zeros((1, C_pad), jnp.float32)
    mask = jnp.zeros((S, C_pad), jnp.float32)
    for ki, (K, w, b) in enumerate(zip(Ks, conv_ws, conv_bs)):
        c0 = ki * Co
        w_fused = w_fused.at[:K, :, c0:c0 + Co].set(w)
        b_fused = b_fused.at[:, c0:c0 + Co].set(b)
        mask = mask.at[:S - K + 1, c0:c0 + Co].set(1.0)   # valid conv length

    fc_w_p = jnp.zeros((C_pad, D_pad), jnp.float32).at[:n_out, :out_dim].set(fc_w)
    fc_b_p = jnp.zeros((1, D_pad), jnp.float32).at[:, :out_dim].set(fc_b)

    return dict(
        w_fused=w_fused.astype(param_dtype),   # bf16 MXU operands
        b_fused=b_fused,                       # f32 (VPU work stays f32)
        mask=mask,                             # f32
        fc_w=fc_w_p.astype(param_dtype),
        fc_b=fc_b_p,
        Kmax=Kmax, S=S, E=E, out_dim=out_dim,
    )


def _choose_tb(B, S, S_ext, E, C_pad, x_itemsize, budget_bytes=24 << 20):
    """Batch tile size: ~512-2048 slab rows/step, bounded by a VMEM budget
    that is safe on v7x's 64 MiB (conservatively half of v6e sizing)."""
    # Per-sample resident bytes: double-buffered streamed x tile + f32 conv
    # intermediates (accumulator + masked/ReLU'd copy).
    per_sample = 2 * S_ext * E * x_itemsize + 2 * S * C_pad * 4
    tb_budget = max(1, budget_bytes // per_sample)
    tb_rows = max(1, 2048 // max(S, 1))
    tb = min(tb_budget, tb_rows, B)
    if tb >= B:
        return B                        # single tile: full-extent block is legal
    return max(8, (tb // 8) * 8)        # multi-tile: keep sublane-clean out block


def kim_cnn_forward(x, params):
    """x: (B, S, E) f32. params: output of prepare_kimcnn_params."""
    B, S, E = x.shape
    Kmax = params["Kmax"]
    w_fused = params["w_fused"]
    C_pad = int(w_fused.shape[2])
    D_pad = int(params["fc_w"].shape[1])
    out_dim = params["out_dim"]
    S_ext = S + Kmax - 1

    x_item = jnp.dtype(w_fused.dtype).itemsize
    TB = _choose_tb(B, S, S_ext, E, C_pad, x_item)
    n_tiles = int(pl.cdiv(B, TB))
    B_pad = n_tiles * TB

    # Streamed input: bf16, E left UNpadded (full-extent last block dim), S
    # zero-extended by Kmax-1 rows so every tap window stays in bounds, batch
    # zero-padded to a whole number of tiles (extra rows sliced off below).
    x_p = jnp.zeros((B_pad, S_ext, E), w_fused.dtype)
    x_p = x_p.at[:B, :S, :].set(x.astype(w_fused.dtype))

    # VMEM budget with headroom for double buffering; raise v5e's 16 MiB
    # scoped default, stay under v7x's 64 MiB physical.
    per_sample = 2 * S_ext * E * x_item + 2 * S * C_pad * 4
    param_bytes = ((Kmax * E * C_pad + C_pad * D_pad) * x_item
                   + (C_pad + S * C_pad + D_pad) * 4)
    vmem_limit = int(min(48 << 20, max(32 << 20, 2 * (TB * per_sample + param_bytes))))

    kernel = functools.partial(_kimcnn_kernel, Kmax, S)
    out = pl.pallas_call(
        kernel,
        out_shape=jax.ShapeDtypeStruct((B_pad, D_pad), jnp.float32),
        grid=(n_tiles,),
        in_specs=[
            # Only x streams per grid step.
            pl.BlockSpec((TB, S_ext, E), lambda i: (i, 0, 0)),
            # Parameters: constant index maps -> fetched once, VMEM-resident.
            pl.BlockSpec((Kmax, E, C_pad), lambda i: (0, 0, 0)),
            pl.BlockSpec((1, C_pad), lambda i: (0, 0)),
            pl.BlockSpec((S, C_pad), lambda i: (0, 0)),
            pl.BlockSpec((C_pad, D_pad), lambda i: (0, 0)),
            pl.BlockSpec((1, D_pad), lambda i: (0, 0)),
        ],
        out_specs=pl.BlockSpec((TB, D_pad), lambda i: (i, 0)),
        compiler_params=pltpu.CompilerParams(
            dimension_semantics=("parallel",),      # v7x megacore sharding
            vmem_limit_bytes=vmem_limit),
    )(x_p, w_fused, params["b_fused"], params["mask"],
      params["fc_w"], params["fc_b"])
    return out[:B, :out_dim]


def ref_forward(x, conv_ws, conv_bs, fc_w, fc_b):
    """Pure-JAX f32 reference mirroring the PyTorch forward (eval mode)."""
    B, S, _ = x.shape
    feats = []
    for w, bias in zip(conv_ws, conv_bs):
        K, _, Co = w.shape
        L = S - K + 1
        conv = jnp.zeros((B, L, Co), jnp.float32)
        for k in range(K):
            conv = conv + jnp.einsum('ble,ec->blc', x[:, k:k + L, :], w[k])
        conv = jax.nn.relu(conv + bias)          # (B, L, Co)
        feats.append(jnp.max(conv, axis=1))      # (B, Co)
    feat = jnp.concatenate(feats, axis=1)        # (B, nK*Co)
    return feat @ fc_w + fc_b


if __name__ == "__main__":
    # Module hyperparameters (small, consistent with KimCNN.__init__)
    kernel_num = 4      # Co
    kernel_size = 3     # Ks = 1..3
    embsize = 32        # E
    out_dim = 8
    B, S = 2, 8
    Ks = list(range(1, kernel_size + 1))
    n_out = len(Ks) * kernel_num

    key = jax.random.PRNGKey(0)
    key, kx = jax.random.split(key)
    x = jax.random.normal(kx, (B, S, embsize), dtype=jnp.float32)

    conv_ws, conv_bs = [], []
    for K in Ks:
        key, kw, kb = jax.random.split(key, 3)
        # PyTorch Conv2d weight is (Co, 1, K, E); we store it as (K, E, Co).
        conv_ws.append(0.1 * jax.random.normal(kw, (K, embsize, kernel_num),
                                               dtype=jnp.float32))
        conv_bs.append(0.1 * jax.random.normal(kb, (1, kernel_num),
                                               dtype=jnp.float32))
    key, kfw, kfb = jax.random.split(key, 3)
    # PyTorch Linear weight is (out_dim, n_out); we store its transpose.
    fc_w = 0.1 * jax.random.normal(kfw, (n_out, out_dim), dtype=jnp.float32)
    fc_b = 0.1 * jax.random.normal(kfb, (1, out_dim), dtype=jnp.float32)

    # One-time parameter fusion (weight-only transform, hoisted out of forward).
    params = prepare_kimcnn_params(conv_ws, conv_bs, fc_w, fc_b, S)

    logits = kim_cnn_forward(x, params)
    jax.block_until_ready(logits)

    expected = ref_forward(x, conv_ws, conv_bs, fc_w, fc_b)
    assert logits.shape == (B, out_dim)
    # bf16 MXU operands (f32 accumulation) -> relaxed tolerance vs f32 ref.
    assert jnp.allclose(logits, expected, atol=2e-2, rtol=2e-2)

    print("KERNEL_OK")
</pallas_src>

<mosaic_0001>
module attributes {stable_mosaic.version = 11 : i64} {
  func.func @_kimcnn_kernel(%arg0: i32, %arg1: memref<2x10x32xbf16, #tpu.memory_space<vmem>>, %arg2: memref<3x32x128xbf16, #tpu.memory_space<vmem>>, %arg3: memref<1x128xf32, #tpu.memory_space<vmem>>, %arg4: memref<8x128xf32, #tpu.memory_space<vmem>>, %arg5: memref<128x128xbf16, #tpu.memory_space<vmem>>, %arg6: memref<1x128xf32, #tpu.memory_space<vmem>>, %arg7: memref<2x128xf32, #tpu.memory_space<vmem>>) attributes {dimension_semantics = [#tpu.dimension_semantics<parallel>], iteration_bounds = array<i64: 1>, scalar_prefetch = 0 : i64, scratch_operands = 0 : i64, tpu.core_type = #tpu.core_type<tc>, window_params = [{transform_indices = @transform_0, window_bounds = array<i64: 2, 10, 32>}, {pipeline_mode = #tpu.pipeline_mode<synchronous>, transform_indices = @transform_1, window_bounds = array<i64: 3, 32, 128>}, {pipeline_mode = #tpu.pipeline_mode<synchronous>, transform_indices = @transform_2, window_bounds = array<i64: 1, 128>}, {pipeline_mode = #tpu.pipeline_mode<synchronous>, transform_indices = @transform_3, window_bounds = array<i64: 8, 128>}, {pipeline_mode = #tpu.pipeline_mode<synchronous>, transform_indices = @transform_4, window_bounds = array<i64: 128, 128>}, {pipeline_mode = #tpu.pipeline_mode<synchronous>, transform_indices = @transform_5, window_bounds = array<i64: 1, 128>}, {transform_indices = @transform_6, window_bounds = array<i64: 2, 128>}]} {
    %c0 = arith.constant 0 : index
    %c0_0 = arith.constant 0 : index
    %c0_1 = arith.constant 0 : index
    %0 = vector.load %arg1[%c0, %c0_0, %c0_1] : memref<2x10x32xbf16, #tpu.memory_space<vmem>>, vector<2x10x32xbf16>
    %1 = vector.extract_strided_slice %0 {offsets = [0, 0, 0], sizes = [2, 8, 32], strides = [1, 1, 1]} : vector<2x10x32xbf16> to vector<2x8x32xbf16>
    %2 = vector.shape_cast %1 : vector<2x8x32xbf16> to vector<16x32xbf16>
    %c0_2 = arith.constant 0 : index
    %c0_3 = arith.constant 0 : index
    %c0_4 = arith.constant 0 : index
    %3 = vector.load %arg2[%c0_2, %c0_3, %c0_4] : memref<3x32x128xbf16, #tpu.memory_space<vmem>>, vector<1x32x128xbf16>
    %4 = vector.shape_cast %3 : vector<1x32x128xbf16> to vector<32x128xbf16>
    %cst = arith.constant dense<0.000000e+00> : vector<16x128xf32>
    %5 = tpu.matmul %2, %4, %cst {dimension_numbers = #tpu.dot_dimension_numbers<[1], [0], [0], [1], [0, 0, 1, 1], [], []>} : vector<16x32xbf16>, vector<32x128xbf16>, vector<16x128xf32> -> vector<16x128xf32>
    %6 = vector.extract_strided_slice %0 {offsets = [0, 1, 0], sizes = [2, 8, 32], strides = [1, 1, 1]} : vector<2x10x32xbf16> to vector<2x8x32xbf16>
    %7 = vector.shape_cast %6 : vector<2x8x32xbf16> to vector<16x32xbf16>
    %c1 = arith.constant 1 : index
    %c0_5 = arith.constant 0 : index
    %c0_6 = arith.constant 0 : index
    %8 = vector.load %arg2[%c1, %c0_5, %c0_6] : memref<3x32x128xbf16, #tpu.memory_space<vmem>>, vector<1x32x128xbf16>
    %9 = vector.shape_cast %8 : vector<1x32x128xbf16> to vector<32x128xbf16>
    %cst_7 = arith.constant dense<0.000000e+00> : vector<16x128xf32>
    %10 = tpu.matmul %7, %9, %cst_7 {dimension_numbers = #tpu.dot_dimension_numbers<[1], [0], [0], [1], [0, 0, 1, 1], [], []>} : vector<16x32xbf16>, vector<32x128xbf16>, vector<16x128xf32> -> vector<16x128xf32>
    %11 = arith.addf %5, %10 : vector<16x128xf32>
    %12 = vector.extract_strided_slice %0 {offsets = [0, 2, 0], sizes = [2, 8, 32], strides = [1, 1, 1]} : vector<2x10x32xbf16> to vector<2x8x32xbf16>
    %13 = vector.shape_cast %12 : vector<2x8x32xbf16> to vector<16x32xbf16>
    %c2 = arith.constant 2 : index
    %c0_8 = arith.constant 0 : index
    %c0_9 = arith.constant 0 : index
    %14 = vector.load %arg2[%c2, %c0_8, %c0_9] : memref<3x32x128xbf16, #tpu.memory_space<vmem>>, vector<1x32x128xbf16>
    %15 = vector.shape_cast %14 : vector<1x32x128xbf16> to vector<32x128xbf16>
    %cst_10 = arith.constant dense<0.000000e+00> : vector<16x128xf32>
    %16 = tpu.matmul %13, %15, %cst_10 {dimension_numbers = #tpu.dot_dimension_numbers<[1], [0], [0], [1], [0, 0, 1, 1], [], []>} : vector<16x32xbf16>, vector<32x128xbf16>, vector<16x128xf32> -> vector<16x128xf32>
    %17 = arith.addf %11, %16 : vector<16x128xf32>
    %18 = vector.shape_cast %17 : vector<16x128xf32> to vector<2x8x128xf32>
    %c0_11 = arith.constant 0 : index
    %c0_12 = arith.constant 0 : index
    %19 = vector.load %arg4[%c0_11, %c0_12] : memref<8x128xf32, #tpu.memory_space<vmem>>, vector<8x128xf32>
    %cst_13 = arith.constant 0.000000e+00 : f32
    %20 = vector.broadcast %cst_13 : f32 to vector<8x128xf32>
    %21 = arith.cmpf one, %19, %20 : vector<8x128xf32>
    %c0_14 = arith.constant 0 : index
    %c0_15 = arith.constant 0 : index
    %22 = vector.load %arg3[%c0_14, %c0_15] : memref<1x128xf32, #tpu.memory_space<vmem>>, vector<1x128xf32>
    %23 = vector.shape_cast %22 : vector<1x128xf32> to vector<1x1x128xf32>
    %24 = vector.broadcast %23 : vector<1x1x128xf32> to vector<2x8x128xf32>
    %25 = arith.addf %18, %24 : vector<2x8x128xf32>
    %cst_16 = arith.constant 0.000000e+00 : f32
    %26 = vector.broadcast %cst_16 : f32 to vector<2x8x128xf32>
    %27 = arith.maximumf %25, %26 : vector<2x8x128xf32>
    %cst_17 = arith.constant 0.000000e+00 : f32
    %28 = vector.shape_cast %21 : vector<8x128xi1> to vector<1x8x128xi1>
    %29 = vector.broadcast %28 : vector<1x8x128xi1> to vector<2x8x128xi1>
    %30 = vector.broadcast %cst_17 : f32 to vector<2x8x128xf32>
    %31 = arith.select %29, %27, %30 : vector<2x8x128xi1>, vector<2x8x128xf32>
    %cst_18 = arith.constant dense<0xFF800000> : vector<2x128xf32>
    %32 = vector.multi_reduction <maximumf>, %31, %cst_18 [1] : vector<2x8x128xf32> to vector<2x128xf32>
    %33 = arith.truncf %32 : vector<2x128xf32> to vector<2x128xbf16>
    %c0_19 = arith.constant 0 : index
    %c0_20 = arith.constant 0 : index
    %34 = vector.load %arg5[%c0_19, %c0_20] : memref<128x128xbf16, #tpu.memory_space<vmem>>, vector<128x128xbf16>
    %cst_21 = arith.constant dense<0.000000e+00> : vector<2x128xf32>
    %35 = tpu.matmul %33, %34, %cst_21 {dimension_numbers = #tpu.dot_dimension_numbers<[1], [0], [0], [1], [0, 0, 1, 1], [], []>} : vector<2x128xbf16>, vector<128x128xbf16>, vector<2x128xf32> -> vector<2x128xf32>
    %c0_22 = arith.constant 0 : index
    %c0_23 = arith.constant 0 : index
    %36 = vector.load %arg6[%c0_22, %c0_23] : memref<1x128xf32, #tpu.memory_space<vmem>>, vector<1x128xf32>
    %37 = vector.broadcast %36 : vector<1x128xf32> to vector<2x128xf32>
    %38 = arith.addf %35, %37 : vector<2x128xf32>
    %c0_24 = arith.constant 0 : index
    %c0_25 = arith.constant 0 : index
    %39 = vector.load %arg7[%c0_24, %c0_25] : memref<2x128xf32, #tpu.memory_space<vmem>>, vector<2x128xf32>
    tpu.vector_store %arg7[%c0_24, %c0_25], %38 {strides = array<i32>} : memref<2x128xf32, #tpu.memory_space<vmem>>, vector<2x128xf32>,
    return
  }
  func.func @transform_0(%arg0: i32) -> (i32, i32, i32) {
    %c0_i32 = arith.constant 0 : i32
    %c0_i32_0 = arith.constant 0 : i32
    %c0_i32_1 = arith.constant 0 : i32
    return %arg0, %c0_i32, %c0_i32_0 : i32, i32, i32
  }
  func.func @transform_1(%arg0: i32) -> (i32, i32, i32) {
    %c0_i32 = arith.constant 0 : i32
    %c0_i32_0 = arith.constant 0 : i32
    %c0_i32_1 = arith.constant 0 : i32
    %c0_i32_2 = arith.constant 0 : i32
    return %c0_i32, %c0_i32_0, %c0_i32_1 : i32, i32, i32
  }
  func.func @transform_2(%arg0: i32) -> (i32, i32) {
    %c0_i32 = arith.constant 0 : i32
    %c0_i32_0 = arith.constant 0 : i32
    %c0_i32_1 = arith.constant 0 : i32
    return %c0_i32, %c0_i32_0 : i32, i32
  }
  func.func @transform_3(%arg0: i32) -> (i32, i32) {
    %c0_i32 = arith.constant 0 : i32
    %c0_i32_0 = arith.constant 0 : i32
    %c0_i32_1 = arith.constant 0 : i32
    return %c0_i32, %c0_i32_0 : i32, i32
  }
  func.func @transform_4(%arg0: i32) -> (i32, i32) {
    %c0_i32 = arith.constant 0 : i32
    %c0_i32_0 = arith.constant 0 : i32
    %c0_i32_1 = arith.constant 0 : i32
    return %c0_i32, %c0_i32_0 : i32, i32
  }
  func.func @transform_5(%arg0: i32) -> (i32, i32) {
    %c0_i32 = arith.constant 0 : i32
    %c0_i32_0 = arith.constant 0 : i32
    %c0_i32_1 = arith.constant 0 : i32
    return %c0_i32, %c0_i32_0 : i32, i32
  }
  func.func @transform_6(%arg0: i32) -> (i32, i32) {
    %c0_i32 = arith.constant 0 : i32
    %c0_i32_0 = arith.constant 0 : i32
    return %arg0, %c0_i32 : i32, i32
  }
}

</mosaic_0001>

<llo_original>
// kernel: tpu_custom_call.1
$region0: #{tpu_custom_call.1}
  #allocation0 [shape = 'u32[]', space=smem, size = 0x4, offset = 0x4, fixed_abs, tag = 'smem constant byte address 0x4 - core index']
  #allocation1 [shape = 'u32[144,128]{1,0:T(1,128)}', space=vmem, size = 0x12000, scoped, tag = 'internal scratch']
  %s0 = inlined_call_operand.vmem [shape: bf16[2,10,32], index: 0, kind: input, shape index: {}]
  %s1 = inlined_call_operand.hbm [shape: bf16[3,32,128], index: 1, kind: input, shape index: {}]
  %s2 = inlined_call_operand.vmem [shape: f32[1,128], index: 2, kind: input, shape index: {}]
  %s3 = inlined_call_operand.vmem [shape: f32[8,128], index: 3, kind: input, shape index: {}]
  %s4 = inlined_call_operand.hbm [shape: bf16[128,128], index: 4, kind: input, shape index: {}]
  %s5 = inlined_call_operand.vmem [shape: f32[1,128], index: 5, kind: input, shape index: {}]
  %s6 = inlined_call_operand.hbm [shape: f32[2,128], index: 6, kind: output, shape index: {}]
  %s7 = sld [smem:[#allocation0]]
  $region42: #{tpu_custom_call.1} parent=0
    _
  %s9 = ssub.s32 1, %s7
  %s10 = scalar_select 0, %s9, %s7
  $region1: #{tpu_custom_call.1} parent=0
    #allocation2 [shape = 'u8[24576]{0}', space=vmem, size = 0x6000, scoped, tag = 'input window, operand 1, single buffered']
    #allocation3 [shape = 's32[1]{0}', space=sflag, size = 0x4, scoped, tag = 'scoped memory for tpu_custom_call.1']
    #allocation4 [shape = 's32[1]{0}', space=sflag, size = 0x4, scoped, tag = 'scoped memory for tpu_custom_call.1']
    #allocation5 [shape = 'u8[32768]{0}', space=vmem, size = 0x8000, scoped, tag = 'input window, operand 4, single buffered']
    #allocation6 [shape = 's32[1]{0}', space=sflag, size = 0x4, scoped, tag = 'scoped memory for tpu_custom_call.1']
    #allocation7 [shape = 'u8[1024]{0}', space=vmem, size = 0x400, scoped, tag = 'output window, operand 0, single buffered']
    %11 = vsyncpa [#allocation3], 0
    %12 = vsyncpa [#allocation6], 0
    %13 = vsyncpa [#allocation4], 0
    // Predicated region
    $region2: #{tpu_custom_call.1} parent=1 // pred_check
      _
    $region3: #{tpu_custom_call.1} parent=1 // pred_check_branch
      %15 = sbr.rel (0) target = $region5
    $region4: #{tpu_custom_call.1} parent=1 // pred_region
      _
    $region5: #{tpu_custom_call.1} parent=1 // pred_fallthru
      _
    // Predicated region
    $region6: #{tpu_custom_call.1} parent=1 // pred_check
      _
    $region7: #{tpu_custom_call.1} parent=1 // pred_check_branch
      %17 = sbr.rel (0) target = $region9
    $region8: #{tpu_custom_call.1} parent=1 // pred_region
      %s19 = ssub.s32 768, 768
      %20 = vsyncadd [#allocation3], %s19
      %s21 = sshll.u32 [#allocation2], 4
      %s22 = int_to_ptr.vmem [resolvable:$true] %s21
      %27 = dma.hbm_to_vmem [thread:$0]  %s1, 768, %s22, [#allocation3], 64, 64, 4
    $region9: #{tpu_custom_call.1} parent=1 // pred_fallthru
      _
    // Predicated region
    $region10: #{tpu_custom_call.1} parent=1 // pred_check
      _
    $region11: #{tpu_custom_call.1} parent=1 // pred_check_branch
      %29 = sbr.rel (0) target = $region13
    $region12: #{tpu_custom_call.1} parent=1 // pred_region
      _
    $region13: #{tpu_custom_call.1} parent=1 // pred_fallthru
      _
    // Predicated region
    $region14: #{tpu_custom_call.1} parent=1 // pred_check
      _
    $region15: #{tpu_custom_call.1} parent=1 // pred_check_branch
      %31 = sbr.rel (0) target = $region17
    $region16: #{tpu_custom_call.1} parent=1 // pred_region
      _
    $region17: #{tpu_custom_call.1} parent=1 // pred_fallthru
      _
    // Predicated region
    $region18: #{tpu_custom_call.1} parent=1 // pred_check
      _
    $region19: #{tpu_custom_call.1} parent=1 // pred_check_branch
      %33 = sbr.rel (0) target = $region21
    $region20: #{tpu_custom_call.1} parent=1 // pred_region
      %s35 = ssub.s32 1024, 1024
      %36 = vsyncadd [#allocation6], %s35
      %s37 = sshll.u32 [#allocation5], 4
      %s38 = int_to_ptr.vmem [resolvable:$true] %s37
      %43 = dma.hbm_to_vmem [thread:$0]  %s4, 1024, %s38, [#allocation6], 64, 64, 4
    $region21: #{tpu_custom_call.1} parent=1 // pred_fallthru
      _
    // Predicated region
    $region22: #{tpu_custom_call.1} parent=1 // pred_check
      _
    $region23: #{tpu_custom_call.1} parent=1 // pred_check_branch
      %45 = sbr.rel (0) target = $region25
    $region24: #{tpu_custom_call.1} parent=1 // pred_region
      _
    $region25: #{tpu_custom_call.1} parent=1 // pred_fallthru
      _
    // Predicated region
    $region26: #{tpu_custom_call.1} parent=1 // pred_check
      _
    $region27: #{tpu_custom_call.1} parent=1 // pred_check_branch
      %47 = sbr.rel (0) target = $region29
    $region28: #{tpu_custom_call.1} parent=1 // pred_region
      %48 = dma.done [#allocation3], 768
    $region29: #{tpu_custom_call.1} parent=1 // pred_fallthru
      _
    // Predicated region
    $region30: #{tpu_custom_call.1} parent=1 // pred_check
      _
    $region31: #{tpu_custom_call.1} parent=1 // pred_check_branch
      %50 = sbr.rel (0) target = $region33
    $region32: #{tpu_custom_call.1} parent=1 // pred_region
      %51 = dma.done [#allocation6], 1024
    $region33: #{tpu_custom_call.1} parent=1 // pred_fallthru
      _
    %v53 = vld [vmem:[%s0] sm:$0xf]
    %v54 = vld [vmem:[%s0 + $0x4] sm:$0x1]
    %v55 = vld [vmem:[%s0 + $0x8] sm:$0xf]
    %v56 = vld [vmem:[%s0 + $0xc] sm:$0x1]
    %v57 = vld [vmem:[#allocation2] sm:$0xf]
    %v58 = vld [vmem:[#allocation2 + $0x4] sm:$0xf]
    %v59 = vld [vmem:[#allocation2 + $0x8] sm:$0xf]
    %v60 = vld [vmem:[#allocation2 + $0xc] sm:$0xf]
    %vm61 = vsmask.f32 3328
    %vm62 = vsmask.f32 7440
    %vm63 = vmor %vm61, %vm62
    %v65 = vshrl.u32 %v53, 16
    %v67 = vrot.slane %v65, 4
    %v68 = vshll.u32 %v53, 16
    %v70 = vrot.slane %v68, 5
    %v71 = vor.u32 %v67, %v70
    %v72 = vrot.slane %v71, 4
    %v74 = vshll.u32 %v54, 16
    %v76 = vrot.slane %v74, 5
    %v77 = vsel %vm63, %v72, %v76
    %v79 = vshrl.u32 %v55, 16
    %v81 = vrot.slane %v79, 4
    %v82 = vshll.u32 %v55, 16
    %v84 = vrot.slane %v82, 5
    %v85 = vor.u32 %v81, %v84
    %v86 = vrot.slane %v85, 4
    %v88 = vshll.u32 %v56, 16
    %v90 = vrot.slane %v88, 5
    %v91 = vsel %vm63, %v86, %v90
    %s92 = scalar_lea.vmem [#allocation2], 16
    %v93 = vld [vmem:[%s92] sm:$0xf]
    %v94 = vld [vmem:[%s92 + $0x4] sm:$0xf]
    %v95 = vld [vmem:[%s92 + $0x8] sm:$0xf]
    %v96 = vld [vmem:[%s92 + $0xc] sm:$0xf]
    %v97 = vunpack.c.l.b16 %v77
    %v98 = vunpack.c.l.b16 %v91
    %v99 = vpack.c.b16 %v98, %v97
    %v104 = vunpack.c.l.b16 %v93
    %v105 = vunpack.c.l.b16 %v94
    %v106 = vunpack.c.l.b16 %v95
    %v107 = vunpack.c.l.b16 %v96
    %v108 = vpack.c.b16 %v105, %v104
    %v109 = vpack.c.b16 %v107, %v106
    %vm112 = vcmask 261120
    %v114 = vsel %vm112, %v99, 0
    %116 = vmatprep.subr.bf16.mxu0 0
    %117 = vmatpush1.bf16.msra.mxu0 %v108
    %118 = vmatprep.subr.bf16.mxu0 0
    %119 = vmatpush1.bf16.msra.mxu0 %v109
    %120 = vmatprep.subr.bf16.mxu0 0
    %121 = vmatpush1.bf16.msra.mxu0 0
    %122 = vmatprep.subr.bf16.mxu0 0
    %123 = vmatpush1.bf16.msra.mxu0 0
    %124 = vmatprep.subr.bf16.mxu0 0
    %125 = vmatpush1.bf16.msra.mxu0 0
    %126 = vmatprep.subr.bf16.mxu0 0
    %127 = vmatpush1.bf16.msra.mxu0 0
    %128 = vmatprep.subr.bf16.mxu0 0
    %129 = vmatpush1.bf16.msra.mxu0 0
    %130 = vmatprep.subr.bf16.mxu0 0
    %131 = vmatpush1.bf16.msra.mxu0 0
    %132 = vmatprep.subr.bf16.mxu0 0
    %133 = vmatpush1.bf16.msra.mxu0 0
    %134 = vmatprep.subr.bf16.mxu0 0
    %135 = vmatpush1.bf16.msra.mxu0 0
    %136 = vmatprep.subr.bf16.mxu0 0
    %137 = vmatpush1.bf16.msra.mxu0 0
    %138 = vmatprep.subr.bf16.mxu0 0
    %139 = vmatpush1.bf16.msra.mxu0 0
    %140 = vmatprep.subr.bf16.mxu0 0
    %141 = vmatpush1.bf16.msra.mxu0 0
    %142 = vmatprep.subr.bf16.mxu0 0
    %143 = vmatpush1.bf16.msra.mxu0 0
    %144 = vmatprep.subr.bf16.mxu0 0
    %145 = vmatpush1.bf16.msra.mxu0 0
    %146 = vmatprep.subr.bf16.mxu0 0
    %147 = vmatpush1.bf16.msra.mxu0 0
    %148 = vmatprep.mubr.bf16.mxu0 0
    %149 = vmatmul.mubr.bf16.gmra.mrb[0].mxu0 %v114
    %v150 = vpop.f32.mrb[0].mxu0
    %v151 = vadd.f32 0.0, %v150
    %v152 = vpop.f32.mrb[0].mxu0
    %v153 = vpop.f32.mrb[0].mxu0
    %v154 = vadd.f32 0.0, %v153
    %v155 = vpop.f32.mrb[0].mxu0
    %156 = vdwg.mxu0
    %v159 = vunpack.c.l.b16 %v53
    %v160 = vunpack.c.l.b16 %v55
    %v161 = vpack.c.b16 %v160, %v159
    %v166 = vunpack.c.l.b16 %v57
    %v167 = vunpack.c.l.b16 %v58
    %v168 = vunpack.c.l.b16 %v59
    %v169 = vunpack.c.l.b16 %v60
    %v170 = vpack.c.b16 %v167, %v166
    %v171 = vpack.c.b16 %v169, %v168
    %v175 = vsel %vm112, %v161, 0
    %177 = vmatprep.subr.bf16.mxu0 0
    %178 = vmatpush1.bf16.msra.mxu0 %v170
    %179 = vmatprep.subr.bf16.mxu0 0
    %180 = vmatpush1.bf16.msra.mxu0 %v171
    %181 = vmatprep.subr.bf16.mxu0 0
    %182 = vmatpush1.bf16.msra.mxu0 0
    %183 = vmatprep.subr.bf16.mxu0 0
    %184 = vmatpush1.bf16.msra.mxu0 0
    %185 = vmatprep.subr.bf16.mxu0 0
    %186 = vmatpush1.bf16.msra.mxu0 0
    %187 = vmatprep.subr.bf16.mxu0 0
    %188 = vmatpush1.bf16.msra.mxu0 0
    %189 = vmatprep.subr.bf16.mxu0 0
    %190 = vmatpush1.bf16.msra.mxu0 0
    %191 = vmatprep.subr.bf16.mxu0 0
    %192 = vmatpush1.bf16.msra.mxu0 0
    %193 = vmatprep.subr.bf16.mxu0 0
    %194 = vmatpush1.bf16.msra.mxu0 0
    %195 = vmatprep.subr.bf16.mxu0 0
    %196 = vmatpush1.bf16.msra.mxu0 0
    %197 = vmatprep.subr.bf16.mxu0 0
    %198 = vmatpush1.bf16.msra.mxu0 0
    %199 = vmatprep.subr.bf16.mxu0 0
    %200 = vmatpush1.bf16.msra.mxu0 0
    %201 = vmatprep.subr.bf16.mxu0 0
    %202 = vmatpush1.bf16.msra.mxu0 0
    %203 = vmatprep.subr.bf16.mxu0 0
    %204 = vmatpush1.bf16.msra.mxu0 0
    %205 = vmatprep.subr.bf16.mxu0 0
    %206 = vmatpush1.bf16.msra.mxu0 0
    %207 = vmatprep.subr.bf16.mxu0 0
    %208 = vmatpush1.bf16.msra.mxu0 0
    %209 = vmatprep.mubr.bf16.mxu0 0
    %210 = vmatmul.mubr.bf16.gmra.mrb[0].mxu0 %v175
    %v211 = vpop.f32.mrb[0].mxu0
    %v212 = vadd.f32 %v151, %v211
    %v213 = vpop.f32.mrb[0].mxu0
    %v214 = vpop.f32.mrb[0].mxu0
    %v215 = vadd.f32 %v154, %v214
    %v216 = vpop.f32.mrb[0].mxu0
    %217 = vdwg.mxu0
    %vm220 = vcmask 1042432
    %vm221 = vcmask 1046532
    %vm222 = vmor %vm220, %vm221
    %v223 = vrot.slane %v53, 5
    %v224 = vrot.slane %v223, 4
    %v225 = vrot.slane %v54, 5
    %v226 = vsel %vm222, %v224, %v225
    %v227 = vrot.slane %v55, 5
    %v228 = vrot.slane %v227, 4
    %v229 = vrot.slane %v56, 5
    %v230 = vsel %vm222, %v228, %v229
    %s231 = scalar_lea.vmem [#allocation2], 32
    %v232 = vld [vmem:[%s231] sm:$0xf]
    %v233 = vld [vmem:[%s231 + $0x4] sm:$0xf]
    %v234 = vld [vmem:[%s231 + $0x8] sm:$0xf]
    %v235 = vld [vmem:[%s231 + $0xc] sm:$0xf]
    %v236 = vunpack.c.l.b16 %v226
    %v237 = vunpack.c.l.b16 %v230
    %v238 = vpack.c.b16 %v237, %v236
    %v243 = vunpack.c.l.b16 %v232
    %v244 = vunpack.c.l.b16 %v233
    %v245 = vunpack.c.l.b16 %v234
    %v246 = vunpack.c.l.b16 %v235
    %v247 = vpack.c.b16 %v244, %v243
    %v248 = vpack.c.b16 %v246, %v245
    %v252 = vsel %vm112, %v238, 0
    %254 = vmatprep.subr.bf16.mxu0 0
    %255 = vmatpush1.bf16.msra.mxu0 %v247
    %256 = vmatprep.subr.bf16.mxu0 0
    %257 = vmatpush1.bf16.msra.mxu0 %v248
    %258 = vmatprep.subr.bf16.mxu0 0
    %259 = vmatpush1.bf16.msra.mxu0 0
    %260 = vmatprep.subr.bf16.mxu0 0
    %261 = vmatpush1.bf16.msra.mxu0 0
    %262 = vmatprep.subr.bf16.mxu0 0
    %263 = vmatpush1.bf16.msra.mxu0 0
    %264 = vmatprep.subr.bf16.mxu0 0
    %265 = vmatpush1.bf16.msra.mxu0 0
    %266 = vmatprep.subr.bf16.mxu0 0
    %267 = vmatpush1.bf16.msra.mxu0 0
    %268 = vmatprep.subr.bf16.mxu0 0
    %269 = vmatpush1.bf16.msra.mxu0 0
    %270 = vmatprep.subr.bf16.mxu0 0
    %271 = vmatpush1.bf16.msra.mxu0 0
    %272 = vmatprep.subr.bf16.mxu0 0
    %273 = vmatpush1.bf16.msra.mxu0 0
    %274 = vmatprep.subr.bf16.mxu0 0
    %275 = vmatpush1.bf16.msra.mxu0 0
    %276 = vmatprep.subr.bf16.mxu0 0
    %277 = vmatpush1.bf16.msra.mxu0 0
    %278 = vmatprep.subr.bf16.mxu0 0
    %279 = vmatpush1.bf16.msra.mxu0 0
    %280 = vmatprep.subr.bf16.mxu0 0
    %281 = vmatpush1.bf16.msra.mxu0 0
    %282 = vmatprep.subr.bf16.mxu0 0
    %283 = vmatpush1.bf16.msra.mxu0 0
    %284 = vmatprep.subr.bf16.mxu0 0
    %285 = vmatpush1.bf16.msra.mxu0 0
    %286 = vmatprep.mubr.bf16.mxu0 0
    %287 = vmatmul.mubr.bf16.gmra.mrb[0].mxu0 %v252
    %v288 = vpop.f32.mrb[0].mxu0
    %v289 = vadd.f32 0.0, %v288
    %v290 = vpop.f32.mrb[0].mxu0
    %v291 = vpop.f32.mrb[0].mxu0
    %v292 = vadd.f32 0.0, %v291
    %v293 = vpop.f32.mrb[0].mxu0
    %294 = vdwg.mxu0
    %v295 = vadd.f32 %v212, %v289
    %v296 = vadd.f32 %v215, %v292
    %v297 = vld [vmem:[%s3] sm:$0xff]
    %vm298 = vcmp.ne.f32.partialorder %v297, 0.0
    %v299 = vld [vmem:[%s2] sm:$0x1]
    %v301 = vlaneseq
    %v302 = vshrl.u32 %v301, 7
    %v303 = vsub.s32 0, %v302
    %v304 = vrot.slane %v299, %v303
    %v306 = vadd.f32 %v295, %v304
    %v307 = vadd.f32 %v296, %v304
    %v308 = vmax.f32 %v306, 0.0
    %v309 = vmax.f32 %v307, 0.0
    %v310 = vsel %vm298, 1, 0
    %vm311 = vcmp.eq.s32.totalorder %v310, 1
    %v312 = vsel %vm311, %v308, 0.0
    %v313 = vsel %vm311, %v309, 0.0
    %v314 = vrot.slane %v312, 4
    %v315 = vmax.f32 %v312, %v314
    %v316 = vrot.slane %v315, 2
    %v317 = vmax.f32 %v315, %v316
    %v318 = vrot.slane %v317, 1
    %v319 = vmax.f32 %v317, %v318
    %v320 = vrot.slane %v313, 4
    %v321 = vmax.f32 %v313, %v320
    %v322 = vrot.slane %v321, 2
    %v323 = vmax.f32 %v321, %v322
    %v324 = vrot.slane %v323, 1
    %v325 = vmax.f32 %v323, %v324
    %v326 = vpack.c.bf16 %v319, %v319
    %v327 = vpack.c.bf16 %v325, %v325
    %v328 = vld [vmem:[#allocation5] sm:$0xf]
    %v329 = vld [vmem:[#allocation5 + $0x4] sm:$0xf]
    %v330 = vld [vmem:[#allocation5 + $0x8] sm:$0xf]
    %v331 = vld [vmem:[#allocation5 + $0xc] sm:$0xf]
    %v332 = vld [vmem:[#allocation5 + $0x10] sm:$0xf]
    %v333 = vld [vmem:[#allocation5 + $0x14] sm:$0xf]
    %v334 = vld [vmem:[#allocation5 + $0x18] sm:$0xf]
    %v335 = vld [vmem:[#allocation5 + $0x1c] sm:$0xf]
    %v336 = vld [vmem:[#allocation5 + $0x20] sm:$0xf]
    %v337 = vld [vmem:[#allocation5 + $0x24] sm:$0xf]
    %v338 = vld [vmem:[#allocation5 + $0x28] sm:$0xf]
    %v339 = vld [vmem:[#allocation5 + $0x2c] sm:$0xf]
    %v340 = vld [vmem:[#allocation5 + $0x30] sm:$0xf]
    %v341 = vld [vmem:[#allocation5 + $0x34] sm:$0xf]
    %v342 = vld [vmem:[#allocation5 + $0x38] sm:$0xf]
    %v343 = vld [vmem:[#allocation5 + $0x3c] sm:$0xf]
    %v344 = vld [vmem:[%s5] sm:$0x1]
    %v346 = vlaneseq
    %v347 = vshrl.u32 %v346, 7
    %v348 = vsub.s32 0, %v347
    %v349 = vrot.slane %v344, %v348
    %v353 = vunpack.c.l.b16 %v326
    %v354 = vunpack.c.l.b16 %v327
    %vm355 = vcmask 1041409
    %v356 = vsel %vm355, %v354, %v353
    %v357 = vpack.c.b16 %v356, %v356
    %v375 = vunpack.c.l.b16 %v328
    %v376 = vunpack.c.l.b16 %v329
    %v377 = vunpack.c.l.b16 %v330
    %v378 = vunpack.c.l.b16 %v331
    %v379 = vunpack.c.l.b16 %v332
    %v380 = vunpack.c.l.b16 %v333
    %v381 = vunpack.c.l.b16 %v334
    %v382 = vunpack.c.l.b16 %v335
    %v383 = vunpack.c.l.b16 %v336
    %v384 = vunpack.c.l.b16 %v337
    %v385 = vunpack.c.l.b16 %v338
    %v386 = vunpack.c.l.b16 %v339
    %v387 = vunpack.c.l.b16 %v340
    %v388 = vunpack.c.l.b16 %v341
    %v389 = vunpack.c.l.b16 %v342
    %v390 = vunpack.c.l.b16 %v343
    %v391 = vpack.c.b16 %v376, %v375
    %v392 = vpack.c.b16 %v378, %v377
    %v393 = vpack.c.b16 %v380, %v379
    %v394 = vpack.c.b16 %v382, %v381
    %v395 = vpack.c.b16 %v384, %v383
    %v396 = vpack.c.b16 %v386, %v385
    %v397 = vpack.c.b16 %v388, %v387
    %v398 = vpack.c.b16 %v390, %v389
    %407 = vmatprep.subr.bf16.mxu0 0
    %408 = vmatpush1.bf16.msra.mxu0 %v391
    %409 = vmatprep.subr.bf16.mxu0 0
    %410 = vmatpush1.bf16.msra.mxu0 %v392
    %411 = vmatprep.subr.bf16.mxu0 0
    %412 = vmatpush1.bf16.msra.mxu0 %v393
    %413 = vmatprep.subr.bf16.mxu0 0
    %414 = vmatpush1.bf16.msra.mxu0 %v394
    %415 = vmatprep.subr.bf16.mxu0 0
    %416 = vmatpush1.bf16.msra.mxu0 %v395
    %417 = vmatprep.subr.bf16.mxu0 0
    %418 = vmatpush1.bf16.msra.mxu0 %v396
    %419 = vmatprep.subr.bf16.mxu0 0
    %420 = vmatpush1.bf16.msra.mxu0 %v397
    %421 = vmatprep.subr.bf16.mxu0 0
    %422 = vmatpush1.bf16.msra.mxu0 %v398
    %423 = vmatprep.subr.bf16.mxu0 0
    %424 = vmatpush1.bf16.msra.mxu0 0
    %425 = vmatprep.subr.bf16.mxu0 0
    %426 = vmatpush1.bf16.msra.mxu0 0
    %427 = vmatprep.subr.bf16.mxu0 0
    %428 = vmatpush1.bf16.msra.mxu0 0
    %429 = vmatprep.subr.bf16.mxu0 0
    %430 = vmatpush1.bf16.msra.mxu0 0
    %431 = vmatprep.subr.bf16.mxu0 0
    %432 = vmatpush1.bf16.msra.mxu0 0
    %433 = vmatprep.subr.bf16.mxu0 0
    %434 = vmatpush1.bf16.msra.mxu0 0
    %435 = vmatprep.subr.bf16.mxu0 0
    %436 = vmatpush1.bf16.msra.mxu0 0
    %437 = vmatprep.subr.bf16.mxu0 0
    %438 = vmatpush1.bf16.msra.mxu0 0
    %439 = vmatprep.mubr.bf16.mxu0 0
    %440 = vmatmul.mubr.bf16.gmra.mrb[0].mxu0 %v357
    %v441 = vpop.f32.mrb[0].mxu0
    %v442 = vadd.f32 %v349, %v441
    %v443 = vpop.f32.mrb[0].mxu0
    %v444 = vpop.f32.mrb[0].mxu0
    %v445 = vpop.f32.mrb[0].mxu0
    %446 = vdwg.mxu0
    %447 = vst [vmem:[#allocation7] sm:$0x3] %v442
    // Predicated region
    $region34: #{tpu_custom_call.1} parent=1 // pred_check
      _
    $region35: #{tpu_custom_call.1} parent=1 // pred_check_branch
      %449 = sbr.rel (0) target = $region37
    $region36: #{tpu_custom_call.1} parent=1 // pred_region
      %s451 = ssub.s32 32, 32
      %452 = vsyncadd [#allocation4], %s451
      %s454 = sshll.u32 [#allocation7], 4
      %s455 = int_to_ptr.vmem [resolvable:$true] %s454
      %457 = dma.vmem_to_hbm [thread:$0]  %s455, 32, %s6, [#allocation4]
    $region37: #{tpu_custom_call.1} parent=1 // pred_fallthru
      _
    // Predicated region
    $region38: #{tpu_custom_call.1} parent=1 // pred_check
      _
    $region39: #{tpu_custom_call.1} parent=1 // pred_check_branch
      %459 = sbr.rel (0) target = $region41
    $region40: #{tpu_custom_call.1} parent=1 // pred_region
      %460 = dma.done [#allocation4], 32
    $region41: #{tpu_custom_call.1} parent=1 // pred_fallthru
      _
    %461 = vsyncpa [#allocation3], 1
    %462 = vsyncpa [#allocation6], 1
    %463 = vsyncpa [#allocation4], 1

</llo_original>
